<compile_context>
chip_gen: v5e
topology: v5e:2x2
jax: 0.10.0
libtpu: 0.0.40
codegen_flags: <defaults>
</compile_context>

<pallas_src>
import functools

import numpy as np
import jax
import jax.numpy as jnp
from jax.experimental import pallas as pl
from jax.experimental.pallas import tpu as pltpu


def _axis_conv_kernel(*refs, num_layers):
    # refs = x, (w_t, b) * num_layers, out
    x_ref = refs[0]
    layer_refs = refs[1:1 + 2 * num_layers]
    out_ref = refs[1 + 2 * num_layers]

    h = x_ref[...]                                    # (tile_m, C_in), compute dtype (bf16)
    for i in range(num_layers):
        w_t = layer_refs[2 * i][...]                  # (C_prev, C_out), compute dtype
        b = layer_refs[2 * i + 1][...]                # (1, C_out), f32
        acc = jnp.dot(h, w_t, preferred_element_type=jnp.float32)   # MXU, f32 accumulate
        act = jnp.maximum(acc + b, 0.0)               # bias + ReLU in f32 (VPU)
        h = act.astype(w_t.dtype) if i + 1 < num_layers else act
    out_ref[...] = h.astype(out_ref.dtype)


def axis_conv_forward(xyz, grouped_points, params, *, tile_m=128,
                      compute_dtype=jnp.bfloat16):
    """AxisConv.forward.  xyz/grouped_points are channels-first (B, C, K, N) like PyTorch.

    Returns (B, mlp[-1], K, N) float32.
    """
    xyz = xyz.astype(jnp.float32)
    if grouped_points is None:
        feat = xyz
    else:
        feat = jnp.concatenate([grouped_points.astype(jnp.float32), xyz], axis=1)
    B, c_in, K, N = feat.shape

    conv_ws = params["conv_ws"]          # list of effective (C_out, C_prev) weights
    conv_bs = params["conv_bs"]
    num_layers = len(conv_ws)
    assert num_layers >= 1
    c_last = conv_ws[-1].shape[0]

    # channels-last; flatten all B*K*N points into the matmul M dimension.
    x = jnp.transpose(feat, (0, 2, 3, 1)).reshape(B * K * N, c_in)
    m = x.shape[0]
    m_pad = ((m + tile_m - 1) // tile_m) * tile_m
    if m_pad != m:
        # 1x1 conv is per-point, padded rows are independent garbage and get sliced off.
        x = jnp.pad(x, ((0, m_pad - m), (0, 0)))
    x = x.astype(compute_dtype)

    args = [x]
    in_specs = [pl.BlockSpec((tile_m, c_in), lambda i: (i, 0))]
    for w, b in zip(conv_ws, conv_bs):
        w_t = jnp.transpose(w).astype(compute_dtype)          # (C_prev, C_out)
        args += [w_t, b.reshape(1, -1).astype(jnp.float32)]
        in_specs += [pl.BlockSpec(w_t.shape, lambda i: (0, 0)),
                     pl.BlockSpec((1, w.shape[0]), lambda i: (0, 0))]

    out_shape = jax.ShapeDtypeStruct((m_pad, c_last), jnp.float32)
    out_specs = pl.BlockSpec((tile_m, c_last), lambda i: (i, 0))

    # Advisory cost estimate so XLA can overlap this small custom call.
    itemsize = np.dtype(compute_dtype).itemsize
    flops = 0
    bytes_accessed = m_pad * c_in * itemsize + m_pad * c_last * 4
    prev = c_in
    for w in conv_ws:
        c_out = w.shape[0]
        flops += 2 * m_pad * prev * c_out
        bytes_accessed += prev * c_out * itemsize + c_out * 4
        prev = c_out

    kernel = functools.partial(_axis_conv_kernel, num_layers=num_layers)
    y = pl.pallas_call(
        kernel,
        grid=(m_pad // tile_m,),
        in_specs=in_specs,
        out_specs=out_specs,
        out_shape=out_shape,
        compiler_params=pltpu.CompilerParams(
            dimension_semantics=("parallel",)),
        cost_estimate=pl.CostEstimate(
            flops=flops, transcendentals=0, bytes_accessed=bytes_accessed),
    )(*args)

    y = y[:m].reshape(B, K, N, c_last)
    return jnp.transpose(y, (0, 3, 1, 2))                      # back to (B, C_last, K, N)


def _fold_weight_norm(v, g):
    """weight_norm (dim=0) inference fold: W = g * v / ||v||_row."""
    norm = jnp.sqrt(jnp.sum(v * v, axis=1, keepdims=True))
    return v * (g[:, None] / norm)


def init_params(key, in_channel, mlp):
    """Deterministic synthetic parameters; weight_norm folded into effective weights."""
    conv_ws, conv_bs = [], []
    last = in_channel
    for out_ch in mlp:
        key, kv, kg, kb = jax.random.split(key, 4)
        bound = 1.0 / jnp.sqrt(float(last))
        v = jax.random.uniform(kv, (out_ch, last), jnp.float32, -bound, bound)
        g = jax.random.uniform(kg, (out_ch,), jnp.float32, 0.5, 1.5)
        conv_ws.append(_fold_weight_norm(v, g))
        conv_bs.append(jax.random.uniform(kb, (out_ch,), jnp.float32, -bound, bound))
        last = out_ch
    return {"conv_ws": conv_ws, "conv_bs": conv_bs}


def _ref_forward(xyz, grouped_points, params):
    """Pure-JAX reference (f32) of AxisConv.forward."""
    if grouped_points is None:
        feat = xyz
    else:
        feat = jnp.concatenate([grouped_points, xyz], axis=1)
    h = jnp.transpose(feat, (0, 2, 3, 1))                      # (B, K, N, C)
    for w, b in zip(params["conv_ws"], params["conv_bs"]):
        h = jnp.maximum(jnp.einsum("bknc,oc->bkno", h, w) + b, 0.0)
    return jnp.transpose(h, (0, 3, 1, 2))


if __name__ == "__main__":
    key = jax.random.PRNGKey(0)
    B, K, N = 2, 8, 16          # B*K*N = 256 points -> grid of 2 tiles of 128 rows
    c_xyz, c_pts = 3, 13        # concat -> in_channel = 16
    mlp = [32, 64]
    in_channel = c_pts + c_xyz

    k_xyz, k_pts, k_par = jax.random.split(key, 3)
    xyz = jax.random.uniform(k_xyz, (B, c_xyz, K, N), jnp.float32, -1.0, 1.0)
    grouped_points = jax.random.normal(k_pts, (B, c_pts, K, N), jnp.float32)

    params = init_params(k_par, in_channel, mlp)

    out = axis_conv_forward(xyz, grouped_points, params, tile_m=128)
    jax.block_until_ready(out)

    assert out.shape == (B, mlp[-1], K, N)
    assert bool(jnp.all(jnp.isfinite(out)))
    assert bool(jnp.all(out >= 0.0))        # ReLU output

    # correctness vs. pure-JAX f32 reference (bf16 matmuls -> loose tolerance)
    ref = _ref_forward(xyz, grouped_points, params)
    assert bool(jnp.allclose(out, ref, atol=5e-2, rtol=5e-2))

    print("KERNEL_OK")
</pallas_src>

<mosaic_0001>
module attributes {stable_mosaic.version = 11 : i64} {
  func.func @_axis_conv_kernel(%arg0: i32, %arg1: memref<128x16xbf16, #tpu.memory_space<vmem>>, %arg2: memref<16x32xbf16, #tpu.memory_space<vmem>>, %arg3: memref<1x32xf32, #tpu.memory_space<vmem>>, %arg4: memref<32x64xbf16, #tpu.memory_space<vmem>>, %arg5: memref<1x64xf32, #tpu.memory_space<vmem>>, %arg6: memref<128x64xf32, #tpu.memory_space<vmem>>) attributes {dimension_semantics = [#tpu.dimension_semantics<parallel>], iteration_bounds = array<i64: 2>, scalar_prefetch = 0 : i64, scratch_operands = 0 : i64, tpu.core_type = #tpu.core_type<tc>, window_params = [{transform_indices = @transform_0, window_bounds = array<i64: 128, 16>}, {pipeline_mode = #tpu.pipeline_mode<synchronous>, transform_indices = @transform_1, window_bounds = array<i64: 16, 32>}, {pipeline_mode = #tpu.pipeline_mode<synchronous>, transform_indices = @transform_2, window_bounds = array<i64: 1, 32>}, {pipeline_mode = #tpu.pipeline_mode<synchronous>, transform_indices = @transform_3, window_bounds = array<i64: 32, 64>}, {pipeline_mode = #tpu.pipeline_mode<synchronous>, transform_indices = @transform_4, window_bounds = array<i64: 1, 64>}, {transform_indices = @transform_5, window_bounds = array<i64: 128, 64>}]} {
    %c0 = arith.constant 0 : index
    %c0_0 = arith.constant 0 : index
    %0 = vector.load %arg1[%c0, %c0_0] : memref<128x16xbf16, #tpu.memory_space<vmem>>, vector<128x16xbf16>
    %c0_1 = arith.constant 0 : index
    %c0_2 = arith.constant 0 : index
    %1 = vector.load %arg2[%c0_1, %c0_2] : memref<16x32xbf16, #tpu.memory_space<vmem>>, vector<16x32xbf16>
    %c0_3 = arith.constant 0 : index
    %c0_4 = arith.constant 0 : index
    %2 = vector.load %arg3[%c0_3, %c0_4] : memref<1x32xf32, #tpu.memory_space<vmem>>, vector<1x32xf32>
    %cst = arith.constant dense<0.000000e+00> : vector<128x32xf32>
    %3 = tpu.matmul %0, %1, %cst {dimension_numbers = #tpu.dot_dimension_numbers<[1], [0], [0], [1], [0, 0, 1, 1], [], []>} : vector<128x16xbf16>, vector<16x32xbf16>, vector<128x32xf32> -> vector<128x32xf32>
    %4 = vector.broadcast %2 : vector<1x32xf32> to vector<128x32xf32>
    %5 = arith.addf %3, %4 : vector<128x32xf32>
    %cst_5 = arith.constant 0.000000e+00 : f32
    %6 = vector.broadcast %cst_5 : f32 to vector<128x32xf32>
    %7 = arith.maximumf %5, %6 : vector<128x32xf32>
    %8 = arith.truncf %7 : vector<128x32xf32> to vector<128x32xbf16>
    %c0_6 = arith.constant 0 : index
    %c0_7 = arith.constant 0 : index
    %9 = vector.load %arg4[%c0_6, %c0_7] : memref<32x64xbf16, #tpu.memory_space<vmem>>, vector<32x64xbf16>
    %c0_8 = arith.constant 0 : index
    %c0_9 = arith.constant 0 : index
    %10 = vector.load %arg5[%c0_8, %c0_9] : memref<1x64xf32, #tpu.memory_space<vmem>>, vector<1x64xf32>
    %cst_10 = arith.constant dense<0.000000e+00> : vector<128x64xf32>
    %11 = tpu.matmul %8, %9, %cst_10 {dimension_numbers = #tpu.dot_dimension_numbers<[1], [0], [0], [1], [0, 0, 1, 1], [], []>} : vector<128x32xbf16>, vector<32x64xbf16>, vector<128x64xf32> -> vector<128x64xf32>
    %12 = vector.broadcast %10 : vector<1x64xf32> to vector<128x64xf32>
    %13 = arith.addf %11, %12 : vector<128x64xf32>
    %cst_11 = arith.constant 0.000000e+00 : f32
    %14 = vector.broadcast %cst_11 : f32 to vector<128x64xf32>
    %15 = arith.maximumf %13, %14 : vector<128x64xf32>
    %c0_12 = arith.constant 0 : index
    %c0_13 = arith.constant 0 : index
    %16 = vector.load %arg6[%c0_12, %c0_13] : memref<128x64xf32, #tpu.memory_space<vmem>>, vector<128x64xf32>
    tpu.vector_store %arg6[%c0_12, %c0_13], %15 {strides = array<i32>} : memref<128x64xf32, #tpu.memory_space<vmem>>, vector<128x64xf32>,
    return
  }
  func.func @transform_0(%arg0: i32) -> (i32, i32) {
    %c0_i32 = arith.constant 0 : i32
    %c0_i32_0 = arith.constant 0 : i32
    return %arg0, %c0_i32 : i32, i32
  }
  func.func @transform_1(%arg0: i32) -> (i32, i32) {
    %c0_i32 = arith.constant 0 : i32
    %c0_i32_0 = arith.constant 0 : i32
    %c0_i32_1 = arith.constant 0 : i32
    return %c0_i32, %c0_i32_0 : i32, i32
  }
  func.func @transform_2(%arg0: i32) -> (i32, i32) {
    %c0_i32 = arith.constant 0 : i32
    %c0_i32_0 = arith.constant 0 : i32
    %c0_i32_1 = arith.constant 0 : i32
    return %c0_i32, %c0_i32_0 : i32, i32
  }
  func.func @transform_3(%arg0: i32) -> (i32, i32) {
    %c0_i32 = arith.constant 0 : i32
    %c0_i32_0 = arith.constant 0 : i32
    %c0_i32_1 = arith.constant 0 : i32
    return %c0_i32, %c0_i32_0 : i32, i32
  }
  func.func @transform_4(%arg0: i32) -> (i32, i32) {
    %c0_i32 = arith.constant 0 : i32
    %c0_i32_0 = arith.constant 0 : i32
    %c0_i32_1 = arith.constant 0 : i32
    return %c0_i32, %c0_i32_0 : i32, i32
  }
  func.func @transform_5(%arg0: i32) -> (i32, i32) {
    %c0_i32 = arith.constant 0 : i32
    %c0_i32_0 = arith.constant 0 : i32
    return %arg0, %c0_i32 : i32, i32
  }
}

</mosaic_0001>

<llo_original>
// kernel: tpu_custom_call.1
$region0: #{tpu_custom_call.1}
  #allocation0 [shape = 'u32[]', space=smem, size = 0x4, offset = 0x4, fixed_abs, tag = 'smem constant byte address 0x4 - core index']
  #allocation1 [shape = 'u32[72,128]{1,0:T(1,128)}', space=vmem, size = 0x9000, scoped, tag = 'internal scratch']
  %s0 = inlined_call_operand.vmem [shape: bf16[256,16], index: 0, kind: input, shape index: {}]
  %s1 = inlined_call_operand.vmem [shape: bf16[16,32], index: 1, kind: input, shape index: {}]
  %s2 = inlined_call_operand.vmem [shape: f32[1,32], index: 2, kind: input, shape index: {}]
  %s3 = inlined_call_operand.vmem [shape: bf16[32,64], index: 3, kind: input, shape index: {}]
  %s4 = inlined_call_operand.vmem [shape: f32[1,64], index: 4, kind: input, shape index: {}]
  %s5 = inlined_call_operand.vmem [shape: f32[256,64], index: 5, kind: output, shape index: {}]
  %s6 = sld [smem:[#allocation0]]
  $region53: #{tpu_custom_call.1} parent=0
    _
  %s8 = ssub.s32 1, %s6
  %s9 = scalar_select 0, %s8, %s6
  loop: start=0, step=1, limit=4
  $region2: #{tpu_custom_call.1} parent=0 // loop_pre_header
    _
  $region3: #{tpu_custom_call.1} parent=0 // loop_header
    %s11 = sphi 0, %s15
    %p12 = scmp.ge.s32.totalorder %s11, 4
    %s21 = sphi 0, %s23
    %s24 = sphi 0, %s21
    %s25 = sphi 0, %s24
    %s41 = sphi 0, %s25
    %s45 = sphi 0, %s45
    %s47 = sphi 0, %s45
    %s48 = sphi 0, %s47
    %s62 = sphi 0, %s48
    %s66 = sphi 0, %s66
    %s68 = sphi 0, %s66
    %s69 = sphi 0, %s68
    %s83 = sphi 0, %s69
    %s87 = sphi 0, %s87
    %s89 = sphi 0, %s87
    %s90 = sphi 0, %s89
    %s104 = sphi 0, %s90
    %s108 = sphi 0, %s108
    %s110 = sphi 0, %s108
    %s111 = sphi 0, %s110
    %s125 = sphi 0, %s111
    %s131 = sphi 0, %s133
    %s134 = sphi 0, %s131
    %s135 = sphi 0, %s134
    %s151 = sphi 0, %s135
  $region4: #{tpu_custom_call.1} parent=0 // loop_header_branch
    %14 = sbr.rel (%p12) target = $region8
  $region5: #{tpu_custom_call.1} parent=0 // loop_body
    %s16 = ssub.s32 %s11, 1
    %s17 = ssub.s32 %s11, 2
    %s18 = sadd.s32 %s11, 1
    %s19 = ssub.s32 %s11, %s18
    %p20 = scmp.eq.s32.totalorder %s19, 0
    %s22 = sadd.s32 %s21, 1
    %s23 = scalar_select %p20, %s21, %s22
    %p26 = pneg %p20
    %p27 = scmp.eq.s32.totalorder %s11, 1
    %p28 = por %p26, %p27
    %p29 = scmp.ne.s32.totalorder %s21, %s24
    %p30 = scmp.eq.s32.totalorder %s11, 0
    %p31 = por %p29, %p30
    %p32 = scmp.ne.s32.totalorder %s21, %s24
    %p33 = scmp.eq.s32.totalorder %s16, 1
    %p34 = por %p32, %p33
    %p35 = scmp.ne.s32.totalorder %s24, %s25
    %p36 = scmp.eq.s32.totalorder %s16, 0
    %p37 = por %p35, %p36
    %p38 = scmp.ne.s32.totalorder %s24, %s25
    %p39 = scmp.eq.s32.totalorder %s17, 1
    %p40 = por %p38, %p39
    %p42 = scmp.ne.s32.totalorder %s25, %s41
    %p43 = scmp.eq.s32.totalorder %s17, 0
    %p44 = por %p42, %p43
    %s46 = sadd.s32 %s45, 1
    %p49 = scmp.eq.s32.totalorder %s11, 1
    %p50 = scmp.ne.s32.totalorder %s45, %s47
    %p51 = scmp.eq.s32.totalorder %s11, 0
    %p52 = por %p50, %p51
    %p53 = scmp.ne.s32.totalorder %s45, %s47
    %p54 = scmp.eq.s32.totalorder %s16, 1
    %p55 = por %p53, %p54
    %p56 = scmp.ne.s32.totalorder %s47, %s48
    %p57 = scmp.eq.s32.totalorder %s16, 0
    %p58 = por %p56, %p57
    %p59 = scmp.ne.s32.totalorder %s47, %s48
    %p60 = scmp.eq.s32.totalorder %s17, 1
    %p61 = por %p59, %p60
    %p63 = scmp.ne.s32.totalorder %s48, %s62
    %p64 = scmp.eq.s32.totalorder %s17, 0
    %p65 = por %p63, %p64
    %s67 = sadd.s32 %s66, 1
    %p70 = scmp.eq.s32.totalorder %s11, 1
    %p71 = scmp.ne.s32.totalorder %s66, %s68
    %p72 = scmp.eq.s32.totalorder %s11, 0
    %p73 = por %p71, %p72
    %p74 = scmp.ne.s32.totalorder %s66, %s68
    %p75 = scmp.eq.s32.totalorder %s16, 1
    %p76 = por %p74, %p75
    %p77 = scmp.ne.s32.totalorder %s68, %s69
    %p78 = scmp.eq.s32.totalorder %s16, 0
    %p79 = por %p77, %p78
    %p80 = scmp.ne.s32.totalorder %s68, %s69
    %p81 = scmp.eq.s32.totalorder %s17, 1
    %p82 = por %p80, %p81
    %p84 = scmp.ne.s32.totalorder %s69, %s83
    %p85 = scmp.eq.s32.totalorder %s17, 0
    %p86 = por %p84, %p85
    %s88 = sadd.s32 %s87, 1
    %p91 = scmp.eq.s32.totalorder %s11, 1
    %p92 = scmp.ne.s32.totalorder %s87, %s89
    %p93 = scmp.eq.s32.totalorder %s11, 0
    %p94 = por %p92, %p93
    %p95 = scmp.ne.s32.totalorder %s87, %s89
    %p96 = scmp.eq.s32.totalorder %s16, 1
    %p97 = por %p95, %p96
    %p98 = scmp.ne.s32.totalorder %s89, %s90
    %p99 = scmp.eq.s32.totalorder %s16, 0
    %p100 = por %p98, %p99
    %p101 = scmp.ne.s32.totalorder %s89, %s90
    %p102 = scmp.eq.s32.totalorder %s17, 1
    %p103 = por %p101, %p102
    %p105 = scmp.ne.s32.totalorder %s90, %s104
    %p106 = scmp.eq.s32.totalorder %s17, 0
    %p107 = por %p105, %p106
    %s109 = sadd.s32 %s108, 1
    %p112 = scmp.eq.s32.totalorder %s11, 1
    %p113 = scmp.ne.s32.totalorder %s108, %s110
    %p114 = scmp.eq.s32.totalorder %s11, 0
    %p115 = por %p113, %p114
    %p116 = scmp.ne.s32.totalorder %s108, %s110
    %p117 = scmp.eq.s32.totalorder %s16, 1
    %p118 = por %p116, %p117
    %p119 = scmp.ne.s32.totalorder %s110, %s111
    %p120 = scmp.eq.s32.totalorder %s16, 0
    %p121 = por %p119, %p120
    %p122 = scmp.ne.s32.totalorder %s110, %s111
    %p123 = scmp.eq.s32.totalorder %s17, 1
    %p124 = por %p122, %p123
    %p126 = scmp.ne.s32.totalorder %s111, %s125
    %p127 = scmp.eq.s32.totalorder %s17, 0
    %p128 = por %p126, %p127
    %s129 = ssub.s32 %s11, %s18
    %p130 = scmp.eq.s32.totalorder %s129, 0
    %s132 = sadd.s32 %s131, 1
    %s133 = scalar_select %p130, %s131, %s132
    %p136 = pneg %p130
    %p137 = scmp.eq.s32.totalorder %s11, 1
    %p138 = por %p136, %p137
    %p139 = scmp.ne.s32.totalorder %s131, %s134
    %p140 = scmp.eq.s32.totalorder %s11, 0
    %p141 = por %p139, %p140
    %p142 = scmp.ne.s32.totalorder %s131, %s134
    %p143 = scmp.eq.s32.totalorder %s16, 1
    %p144 = por %p142, %p143
    %p145 = scmp.ne.s32.totalorder %s134, %s135
    %p146 = scmp.eq.s32.totalorder %s16, 0
    %p147 = por %p145, %p146
    %p148 = scmp.ne.s32.totalorder %s134, %s135
    %p149 = scmp.eq.s32.totalorder %s17, 1
    %p150 = por %p148, %p149
    %p152 = scmp.ne.s32.totalorder %s135, %s151
    %p153 = scmp.eq.s32.totalorder %s17, 0
    %p154 = por %p152, %p153
    %p155 = scmp.le.s32.totalorder 1, %s11
    %p156 = scmp.lt.s32.totalorder %s11, 3
    %p157 = pnand %p155, %p156
    %p158 = pneg %p157
    // Predicated region
    $region9: #{tpu_custom_call.1} parent=5 // pred_check
      _
    $region10: #{tpu_custom_call.1} parent=5 // pred_check_branch
      %160 = sbr.rel (%p157) target = $region12
    $region11: #{tpu_custom_call.1} parent=5 // pred_region
      %s161 = ssub.s32 %s11, 1
      // Predicated region
      $region13: #{tpu_custom_call.1} parent=11 // pred_check
        %p162 = pneg %p58
      $region14: #{tpu_custom_call.1} parent=11 // pred_check_branch
        %164 = sbr.rel (%p162) target = $region16
      $region15: #{tpu_custom_call.1} parent=11 // pred_region
        _
      $region16: #{tpu_custom_call.1} parent=11 // pred_fallthru
        _
      // Predicated region
      $region17: #{tpu_custom_call.1} parent=11 // pred_check
        %p165 = pneg %p79
      $region18: #{tpu_custom_call.1} parent=11 // pred_check_branch
        %167 = sbr.rel (%p165) target = $region20
      $region19: #{tpu_custom_call.1} parent=11 // pred_region
        _
      $region20: #{tpu_custom_call.1} parent=11 // pred_fallthru
        _
      // Predicated region
      $region21: #{tpu_custom_call.1} parent=11 // pred_check
        %p168 = pneg %p100
      $region22: #{tpu_custom_call.1} parent=11 // pred_check_branch
        %170 = sbr.rel (%p168) target = $region24
      $region23: #{tpu_custom_call.1} parent=11 // pred_region
        _
      $region24: #{tpu_custom_call.1} parent=11 // pred_fallthru
        _
      // Predicated region
      $region25: #{tpu_custom_call.1} parent=11 // pred_check
        %p171 = pneg %p121
      $region26: #{tpu_custom_call.1} parent=11 // pred_check_branch
        %173 = sbr.rel (%p171) target = $region28
      $region27: #{tpu_custom_call.1} parent=11 // pred_region
        _
      $region28: #{tpu_custom_call.1} parent=11 // pred_fallthru
        _
    $region12: #{tpu_custom_call.1} parent=5 // pred_fallthru
      _
    %p174 = scmp.lt.s32.totalorder %s11, 2
    // Predicated region
    $region29: #{tpu_custom_call.1} parent=5 // pred_check
      %p175 = pneg %p174
    $region30: #{tpu_custom_call.1} parent=5 // pred_check_branch
      %177 = sbr.rel (%p175) target = $region32
    $region31: #{tpu_custom_call.1} parent=5 // pred_region
      // Predicated region
      $region33: #{tpu_custom_call.1} parent=31 // pred_check
        %p178 = pneg %p31
      $region34: #{tpu_custom_call.1} parent=31 // pred_check_branch
        %180 = sbr.rel (%p178) target = $region36
      $region35: #{tpu_custom_call.1} parent=31 // pred_region
        %s181 = smul.u32 16, %s11
        %p182 = scmp.lt.s32.totalorder %s181, 31
        %s183 = scalar_select %p182, %s181, 31
        %s184 = smul.addr %s183, 4
        %s185 = scalar_lea.vmem %s0, %s184
        %s186 = smul.u32 16, %s11
      $region36: #{tpu_custom_call.1} parent=31 // pred_fallthru
        _
    $region32: #{tpu_custom_call.1} parent=5 // pred_fallthru
      _
    %p187 = scmp.le.s32.totalorder 1, %s11
    %p188 = scmp.lt.s32.totalorder %s11, 3
    %p189 = pnand %p187, %p188
    %p190 = pneg %p189
    // Predicated region
    $region37: #{tpu_custom_call.1} parent=5 // pred_check
      _
    $region38: #{tpu_custom_call.1} parent=5 // pred_check_branch
      %192 = sbr.rel (%p189) target = $region40
    $region39: #{tpu_custom_call.1} parent=5 // pred_region
      %s193 = ssub.s32 %s11, 1
      %s194 = smul.u32 16, %s16
      %p195 = scmp.lt.s32.totalorder %s194, 31
      %s196 = scalar_select %p195, %s194, 31
      %s197 = smul.addr %s196, 4
      %s198 = scalar_lea.vmem %s0, %s197
      %p199 = pneg %p37
      %p200 = pneg %p34
      %p201 = pneg %p58
      %p202 = pneg %p55
      %p203 = pneg %p79
      %p204 = pneg %p76
      %p205 = pneg %p100
      %p206 = pneg %p97
      %p207 = pneg %p121
      %p208 = pneg %p118
      %p209 = pneg %p147
      %p210 = pneg %p144
      %s211 = smul.u32 16, %s16
      %p212 = scmp.lt.s32.totalorder %s211, 31
      %s213 = scalar_select %p212, %s211, 31
      %s214 = smul.addr %s213, 8
      %s215 = scalar_lea.vmem %s5, %s214
      %s216 = smul.u32 16, %s16
      %p217 = scmp.lt.s32.totalorder %s216, 31
      %s218 = scalar_select %p217, %s216, 31
      %s219 = smul.addr %s218, 4
      %s220 = scalar_lea.vmem %s0, %s219
      %s221 = smul.u32 16, %s16
      %s222 = smul.u32 16, %s16
      %p223 = scmp.lt.s32.totalorder %s222, 31
      %s224 = scalar_select %p223, %s222, 31
      %s225 = smul.addr %s224, 8
      %s226 = scalar_lea.vmem %s5, %s225
      %s227 = smul.u32 16, %s16
      %v229 = vld [vmem:[%s220] sm:$0xf]
      %v230 = vld [vmem:[%s220 + $0x4] sm:$0xf]
      %v231 = vld [vmem:[%s220 + $0x8] sm:$0xf]
      %v232 = vld [vmem:[%s220 + $0xc] sm:$0xf]
      %v233 = vld [vmem:[%s220 + $0x10] sm:$0xf]
      %v234 = vld [vmem:[%s220 + $0x14] sm:$0xf]
      %v235 = vld [vmem:[%s220 + $0x18] sm:$0xf]
      %v236 = vld [vmem:[%s220 + $0x1c] sm:$0xf]
      %v237 = vld [vmem:[%s220 + $0x20] sm:$0xf]
      %v238 = vld [vmem:[%s220 + $0x24] sm:$0xf]
      %v239 = vld [vmem:[%s220 + $0x28] sm:$0xf]
      %v240 = vld [vmem:[%s220 + $0x2c] sm:$0xf]
      %v241 = vld [vmem:[%s220 + $0x30] sm:$0xf]
      %v242 = vld [vmem:[%s220 + $0x34] sm:$0xf]
      %v243 = vld [vmem:[%s220 + $0x38] sm:$0xf]
      %v244 = vld [vmem:[%s220 + $0x3c] sm:$0xf]
      %v245 = vld [vmem:[%s1] sm:$0xf]
      %v246 = vld [vmem:[%s1 + $0x4] sm:$0xf]
      %v247 = vld [vmem:[%s2] sm:$0x1]
      %v249 = vperm.slane %v247, 0
      %v267 = vunpack.c.l.b16 %v229
      %v268 = vunpack.c.l.b16 %v230
      %v269 = vunpack.c.l.b16 %v231
      %v270 = vunpack.c.l.b16 %v232
      %v271 = vunpack.c.l.b16 %v233
      %v272 = vunpack.c.l.b16 %v234
      %v273 = vunpack.c.l.b16 %v235
      %v274 = vunpack.c.l.b16 %v236
      %v275 = vunpack.c.l.b16 %v237
      %v276 = vunpack.c.l.b16 %v238
      %v277 = vunpack.c.l.b16 %v239
      %v278 = vunpack.c.l.b16 %v240
      %v279 = vunpack.c.l.b16 %v241
      %v280 = vunpack.c.l.b16 %v242
      %v281 = vunpack.c.l.b16 %v243
      %v282 = vunpack.c.l.b16 %v244
      %v283 = vpack.c.b16 %v268, %v267
      %v284 = vpack.c.b16 %v270, %v269
      %v285 = vpack.c.b16 %v272, %v271
      %v286 = vpack.c.b16 %v274, %v273
      %v287 = vpack.c.b16 %v276, %v275
      %v288 = vpack.c.b16 %v278, %v277
      %v289 = vpack.c.b16 %v280, %v279
      %v290 = vpack.c.b16 %v282, %v281
      %v293 = vunpack.c.l.b16 %v245
      %v294 = vunpack.c.l.b16 %v246
      %v295 = vpack.c.b16 %v294, %v293
      %vm297 = vcmask 130048
      %v299 = vsel %vm297, %v283, 0
      %v302 = vsel %vm297, %v284, 0
      %v305 = vsel %vm297, %v285, 0
      %v308 = vsel %vm297, %v286, 0
      %v311 = vsel %vm297, %v287, 0
      %v314 = vsel %vm297, %v288, 0
      %v317 = vsel %vm297, %v289, 0
      %v320 = vsel %vm297, %v290, 0
      %322 = vmatpush.bf16.msra.mxu0 0
      %323 = vmatpush.bf16.msra.mxu0 0
      %324 = vmatpush.bf16.msra.mxu0 0
      %325 = vmatpush.bf16.msra.mxu0 0
      %326 = vmatpush.bf16.msra.mxu0 0
      %327 = vmatpush.bf16.msra.mxu0 0
      %328 = vmatpush.bf16.msra.mxu0 0
      %329 = vmatpush.bf16.msra.mxu0 %v295
      %330 = vmatmul.bf16.gmra.mxu0 %v299
      %v331 = vpop.f32.mrf.mxu0
      %v332 = vadd.f32 %v249, %v331
      %v333 = vpop.f32.mrf.mxu0
      %v334 = vadd.f32 %v249, %v333
      %335 = vmatmul.bf16.gmra.mxu0 %v302
      %v336 = vpop.f32.mrf.mxu0
      %v337 = vadd.f32 %v249, %v336
      %v338 = vpop.f32.mrf.mxu0
      %v339 = vadd.f32 %v249, %v338
      %340 = vmatmul.bf16.gmra.mxu0 %v305
      %v341 = vpop.f32.mrf.mxu0
      %v342 = vadd.f32 %v249, %v341
      %v343 = vpop.f32.mrf.mxu0
      %v344 = vadd.f32 %v249, %v343
      %345 = vmatmul.bf16.gmra.mxu0 %v308
      %v346 = vpop.f32.mrf.mxu0
      %v347 = vadd.f32 %v249, %v346
      %v348 = vpop.f32.mrf.mxu0
      %v349 = vadd.f32 %v249, %v348
      %350 = vmatmul.bf16.gmra.mxu0 %v311
      %v351 = vpop.f32.mrf.mxu0
      %v352 = vadd.f32 %v249, %v351
      %v353 = vpop.f32.mrf.mxu0
      %v354 = vadd.f32 %v249, %v353
      %355 = vmatmul.bf16.gmra.mxu0 %v314
      %v356 = vpop.f32.mrf.mxu0
      %v357 = vadd.f32 %v249, %v356
      %v358 = vpop.f32.mrf.mxu0
      %v359 = vadd.f32 %v249, %v358
      %360 = vmatmul.bf16.gmra.mxu0 %v317
      %v361 = vpop.f32.mrf.mxu0
      %v362 = vadd.f32 %v249, %v361
      %v363 = vpop.f32.mrf.mxu0
      %v364 = vadd.f32 %v249, %v363
      %365 = vmatmul.bf16.gmra.mxu0 %v320
      %v366 = vpop.f32.mrf.mxu0
      %v367 = vadd.f32 %v249, %v366
      %v368 = vpop.f32.mrf.mxu0
      %v369 = vadd.f32 %v249, %v368
      %370 = vdwg.mxu0
      %v371 = vmax.f32 %v332, 0.0
      %v372 = vmax.f32 %v334, 0.0
      %v373 = vmax.f32 %v337, 0.0
      %v374 = vmax.f32 %v339, 0.0
      %v375 = vmax.f32 %v342, 0.0
      %v376 = vmax.f32 %v344, 0.0
      %v377 = vmax.f32 %v347, 0.0
      %v378 = vmax.f32 %v349, 0.0
      %v379 = vmax.f32 %v352, 0.0
      %v380 = vmax.f32 %v354, 0.0
      %v381 = vmax.f32 %v357, 0.0
      %v382 = vmax.f32 %v359, 0.0
      %v383 = vmax.f32 %v362, 0.0
      %v384 = vmax.f32 %v364, 0.0
      %v385 = vmax.f32 %v367, 0.0
      %v386 = vmax.f32 %v369, 0.0
      %v387 = vpack.c.bf16 %v372, %v371
      %v388 = vpack.c.bf16 %v374, %v373
      %v389 = vpack.c.bf16 %v376, %v375
      %v390 = vpack.c.bf16 %v378, %v377
      %v391 = vpack.c.bf16 %v380, %v379
      %v392 = vpack.c.bf16 %v382, %v381
      %v393 = vpack.c.bf16 %v384, %v383
      %v394 = vpack.c.bf16 %v386, %v385
      %v395 = vld [vmem:[%s3] sm:$0xf]
      %v396 = vld [vmem:[%s3 + $0x4] sm:$0xf]
      %v397 = vld [vmem:[%s3 + $0x8] sm:$0xf]
      %v398 = vld [vmem:[%s3 + $0xc] sm:$0xf]
      %v399 = vld [vmem:[%s4] sm:$0x1]
      %v401 = vperm.slane %v399, 0
      %v407 = vunpack.c.l.b16 %v395
      %v408 = vunpack.c.l.b16 %v396
      %v409 = vunpack.c.l.b16 %v397
      %v410 = vunpack.c.l.b16 %v398
      %v411 = vpack.c.b16 %v408, %v407
      %v412 = vpack.c.b16 %v410, %v409
      %vm415 = vcmask 261120
      %v417 = vsel %vm415, %v387, 0
      %v420 = vsel %vm415, %v388, 0
      %v423 = vsel %vm415, %v389, 0
      %v426 = vsel %vm415, %v390, 0
      %v429 = vsel %vm415, %v391, 0
      %v432 = vsel %vm415, %v392, 0
      %v435 = vsel %vm415, %v393, 0
      %v438 = vsel %vm415, %v394, 0
      %440 = vmatpush.bf16.msra.mxu0 0
      %441 = vmatpush.bf16.msra.mxu0 0
      %442 = vmatpush.bf16.msra.mxu0 0
      %443 = vmatpush.bf16.msra.mxu0 0
      %444 = vmatpush.bf16.msra.mxu0 0
      %445 = vmatpush.bf16.msra.mxu0 0
      %446 = vmatpush.bf16.msra.mxu0 %v412
      %447 = vmatpush.bf16.msra.mxu0 %v411
      %448 = vmatmul.bf16.gmra.mxu0 %v417
      %v449 = vpop.f32.mrf.mxu0
      %v450 = vadd.f32 %v401, %v449
      %v451 = vpop.f32.mrf.mxu0
      %v452 = vadd.f32 %v401, %v451
      %453 = vmatmul.bf16.gmra.mxu0 %v420
      %v454 = vpop.f32.mrf.mxu0
      %v455 = vadd.f32 %v401, %v454
      %v456 = vpop.f32.mrf.mxu0
      %v457 = vadd.f32 %v401, %v456
      %458 = vmatmul.bf16.gmra.mxu0 %v423
      %v459 = vpop.f32.mrf.mxu0
      %v460 = vadd.f32 %v401, %v459
      %v461 = vpop.f32.mrf.mxu0
      %v462 = vadd.f32 %v401, %v461
      %463 = vmatmul.bf16.gmra.mxu0 %v426
      %v464 = vpop.f32.mrf.mxu0
      %v465 = vadd.f32 %v401, %v464
      %v466 = vpop.f32.mrf.mxu0
      %v467 = vadd.f32 %v401, %v466
      %468 = vmatmul.bf16.gmra.mxu0 %v429
      %v469 = vpop.f32.mrf.mxu0
      %v470 = vadd.f32 %v401, %v469
      %v471 = vpop.f32.mrf.mxu0
      %v472 = vadd.f32 %v401, %v471
      %473 = vmatmul.bf16.gmra.mxu0 %v432
      %v474 = vpop.f32.mrf.mxu0
      %v475 = vadd.f32 %v401, %v474
      %v476 = vpop.f32.mrf.mxu0
      %v477 = vadd.f32 %v401, %v476
      %478 = vmatmul.bf16.gmra.mxu0 %v435
      %v479 = vpop.f32.mrf.mxu0
      %v480 = vadd.f32 %v401, %v479
      %v481 = vpop.f32.mrf.mxu0
      %v482 = vadd.f32 %v401, %v481
      %483 = vmatmul.bf16.gmra.mxu0 %v438
      %v484 = vpop.f32.mrf.mxu0
      %v485 = vadd.f32 %v401, %v484
      %v486 = vpop.f32.mrf.mxu0
      %v487 = vadd.f32 %v401, %v486
      %488 = vdwg.mxu0
      %v489 = vmax.f32 %v450, 0.0
      %v490 = vmax.f32 %v452, 0.0
      %v491 = vmax.f32 %v455, 0.0
      %v492 = vmax.f32 %v457, 0.0
      %v493 = vmax.f32 %v460, 0.0
      %v494 = vmax.f32 %v462, 0.0
      %v495 = vmax.f32 %v465, 0.0
      %v496 = vmax.f32 %v467, 0.0
      %v497 = vmax.f32 %v470, 0.0
      %v498 = vmax.f32 %v472, 0.0
      %v499 = vmax.f32 %v475, 0.0
      %v500 = vmax.f32 %v477, 0.0
      %v501 = vmax.f32 %v480, 0.0
      %v502 = vmax.f32 %v482, 0.0
      %v503 = vmax.f32 %v485, 0.0
      %v504 = vmax.f32 %v487, 0.0
      %vm505 = vcmask 523264
      %506 = vst.msk [vmem:[%s226] sm:$0xff] %vm505, %v489
      %507 = vst.msk [vmem:[%s226 + $0x8] sm:$0xff] %vm505, %v490
      %508 = vst.msk [vmem:[%s226 + $0x10] sm:$0xff] %vm505, %v491
      %509 = vst.msk [vmem:[%s226 + $0x18] sm:$0xff] %vm505, %v492
      %510 = vst.msk [vmem:[%s226 + $0x20] sm:$0xff] %vm505, %v493
      %511 = vst.msk [vmem:[%s226 + $0x28] sm:$0xff] %vm505, %v494
      %512 = vst.msk [vmem:[%s226 + $0x30] sm:$0xff] %vm505, %v495
      %513 = vst.msk [vmem:[%s226 + $0x38] sm:$0xff] %vm505, %v496
      %514 = vst.msk [vmem:[%s226 + $0x40] sm:$0xff] %vm505, %v497
      %515 = vst.msk [vmem:[%s226 + $0x48] sm:$0xff] %vm505, %v498
      %516 = vst.msk [vmem:[%s226 + $0x50] sm:$0xff] %vm505, %v499
      %517 = vst.msk [vmem:[%s226 + $0x58] sm:$0xff] %vm505, %v500
      %518 = vst.msk [vmem:[%s226 + $0x60] sm:$0xff] %vm505, %v501
      %519 = vst.msk [vmem:[%s226 + $0x68] sm:$0xff] %vm505, %v502
      %520 = vst.msk [vmem:[%s226 + $0x70] sm:$0xff] %vm505, %v503
      %521 = vst.msk [vmem:[%s226 + $0x78] sm:$0xff] %vm505, %v504
      %s522 = smul.u32 16, %s16
      %p523 = scmp.lt.s32.totalorder %s522, 31
      %s524 = scalar_select %p523, %s522, 31
      %s525 = smul.addr %s524, 8
      %s526 = scalar_lea.vmem %s5, %s525
      // Predicated region
      $region41: #{tpu_custom_call.1} parent=39 // pred_check
        %p527 = pneg %p144
      $region42: #{tpu_custom_call.1} parent=39 // pred_check_branch
        %529 = sbr.rel (%p527) target = $region44
      $region43: #{tpu_custom_call.1} parent=39 // pred_region
        %s530 = smul.u32 16, %s16
      $region44: #{tpu_custom_call.1} parent=39 // pred_fallthru
        _
    $region40: #{tpu_custom_call.1} parent=5 // pred_fallthru
      _
    %p531 = scmp.le.s32.totalorder 2, %s11
    // Predicated region
    $region45: #{tpu_custom_call.1} parent=5 // pred_check
      %p532 = pneg %p531
    $region46: #{tpu_custom_call.1} parent=5 // pred_check_branch
      %534 = sbr.rel (%p532) target = $region48
    $region47: #{tpu_custom_call.1} parent=5 // pred_region
      %s535 = ssub.s32 %s11, 2
      // Predicated region
      $region49: #{tpu_custom_call.1} parent=47 // pred_check
        %p536 = pneg %p150
      $region50: #{tpu_custom_call.1} parent=47 // pred_check_branch
        %538 = sbr.rel (%p536) target = $region52
      $region51: #{tpu_custom_call.1} parent=47 // pred_region
        %s539 = smul.u32 16, %s17
        %p540 = scmp.lt.s32.totalorder %s539, 31
        %s541 = scalar_select %p540, %s539, 31
        %s542 = smul.addr %s541, 8
        %s543 = scalar_lea.vmem %s5, %s542
      $region52: #{tpu_custom_call.1} parent=47 // pred_fallthru
        _
    $region48: #{tpu_custom_call.1} parent=5 // pred_fallthru
      _
  $region6: #{tpu_custom_call.1} parent=0 // loop_footer
    %s15 = sadd.s32 1, %s11
  $region7: #{tpu_custom_call.1} parent=0 // loop_footer_branch
    %10 = sbr.rel target = $region3
  $region8: #{tpu_custom_call.1} parent=0 // loop_exit
    _

</llo_original>
